<compile_context>
chip_gen: v7x
topology: tpu7x:2x2x1
jax: 0.10.0
libtpu: 0.0.40
codegen_flags: <defaults>
</compile_context>

<pallas_src>
import jax
import jax.numpy as jnp
from jax import lax
from jax.experimental import pallas as pl
from jax.experimental.pallas import tpu as pltpu


def _round_up(n: int, m: int) -> int:
    return (n + m - 1) // m * m


def mlp_kernel(x_ref, w1_ref, b1_ref, w2_ref, b2_ref, w3_ref, b3_ref, o_ref):
    """Fused 3-layer MLP (9 -> 64 -> 64 -> 1, ReLU after every layer) on one batch tile.

    x_ref : (tile_b, 9)  batch-major input tile
    w*    : PyTorch-orientation weights (out, in); b*: (out, 1)
    o_ref : (1, tile_b)  lane-dense output row
    """
    x = x_ref[...]                                            # (tile_b, 9) f32

    # Layer 1: (64, 9) . (tile_b, 9)^T -> (64, tile_b)   (q @ k^T style contraction,
    # keeps activations feature-major from the start; no in-kernel transpose op).
    h = lax.dot_general(
        w1_ref[...], x,
        dimension_numbers=(((1,), (1,)), ((), ())),
        preferred_element_type=jnp.float32,
    )
    h = jnp.maximum(h + b1_ref[...], 0.0)                     # (64, tile_b)

    # Layer 2: (64, 64) @ (64, tile_b) -> (64, tile_b)
    h = jnp.dot(w2_ref[...], h, preferred_element_type=jnp.float32)
    h = jnp.maximum(h + b2_ref[...], 0.0)

    # Layer 3: (1, 64) @ (64, tile_b) -> (1, tile_b)  -- lane-dense final row.
    y = jnp.dot(w3_ref[...], h, preferred_element_type=jnp.float32)
    o_ref[...] = jnp.maximum(y + b3_ref[...], 0.0)


def mlp_forward(x, params, *, tile_b=2048):
    """x: (B, 9) float32 -> (B, 1) float32.  params: PyTorch (out,in) weights, (out,1) biases."""
    B, d_in = x.shape
    d_h = params["w1"].shape[0]

    # Batch tile: multiple of 128 lanes; shrink for tiny batches.  At the default
    # 2048 rows the working set (2 double-buffered x tiles + f32 intermediates +
    # resident weights + output buffers) is ~4 MiB, well under the 32 MiB
    # scoped-VMEM default on all generations (v7x has only 64 MiB physical VMEM).
    tile_b = min(tile_b, _round_up(B, 128))
    assert tile_b % 128 == 0
    b_pad = _round_up(B, tile_b)
    if b_pad != B:
        x = jnp.pad(x, ((0, b_pad - B), (0, 0)))   # padded rows are discarded below
    grid = (b_pad // tile_b,)

    flops = 2 * b_pad * (d_in * d_h + d_h * d_h + d_h * 1)
    bytes_accessed = (b_pad * d_in * 4 + b_pad * 4
                      + sum(int(v.size) * 4 for v in params.values()))

    resident = lambda i: (0, 0)   # weights/biases: constant block index -> DMA'd once

    out = pl.pallas_call(
        mlp_kernel,
        out_shape=jax.ShapeDtypeStruct((1, b_pad), jnp.float32),
        grid=grid,
        in_specs=[
            pl.BlockSpec((tile_b, d_in), lambda i: (i, 0)),   # x: tiled over batch
            pl.BlockSpec((d_h, d_in), resident),              # w1 (64, 9)
            pl.BlockSpec((d_h, 1), resident),                 # b1 (64, 1)
            pl.BlockSpec((d_h, d_h), resident),               # w2 (64, 64)
            pl.BlockSpec((d_h, 1), resident),                 # b2 (64, 1)
            pl.BlockSpec((1, d_h), resident),                 # w3 (1, 64)
            pl.BlockSpec((1, 1), resident),                   # b3 (1, 1)
        ],
        out_specs=pl.BlockSpec((1, tile_b), lambda i: (0, i)),
        compiler_params=pltpu.CompilerParams(
            # Batch axis is embarrassingly parallel -> shard grid steps across
            # TensorCores on megacore parts (v7x); harmless no-op on v5e/v6e.
            dimension_semantics=("parallel",),
        ),
        cost_estimate=pl.CostEstimate(
            flops=flops, transcendentals=0, bytes_accessed=bytes_accessed),
    )(x, params["w1"], params["b1"], params["w2"], params["b2"],
      params["w3"], params["b3"])

    return out[0, :B][:, None]


def init_params(key):
    """Deterministic init mimicking nn.Linear's uniform(-1/sqrt(fan_in), +), PyTorch layout."""
    ks = jax.random.split(key, 6)

    def lin(kw, kb, fan_in, fan_out):
        bound = 1.0 / jnp.sqrt(jnp.float32(fan_in))
        w = jax.random.uniform(kw, (fan_out, fan_in), jnp.float32, -bound, bound)
        b = jax.random.uniform(kb, (fan_out, 1), jnp.float32, -bound, bound)
        return w, b

    w1, b1 = lin(ks[0], ks[1], 9, 64)
    w2, b2 = lin(ks[2], ks[3], 64, 64)
    w3, b3 = lin(ks[4], ks[5], 64, 1)
    return {"w1": w1, "b1": b1, "w2": w2, "b2": b2, "w3": w3, "b3": b3}


def mlp_reference(x, p):
    h = jnp.maximum(x @ p["w1"].T + p["b1"].T, 0.0)
    h = jnp.maximum(h @ p["w2"].T + p["b2"].T, 0.0)
    return jnp.maximum(h @ p["w3"].T + p["b3"].T, 0.0)


if __name__ == "__main__":
    key = jax.random.PRNGKey(0)
    kx, kp = jax.random.split(key)
    params = init_params(kp)

    # Small-shape check consistent with the module (features = 9).
    B = 8
    x = jax.random.normal(kx, (B, 9), dtype=jnp.float32)
    out = jax.block_until_ready(mlp_forward(x, params))
    ref = mlp_reference(x, params)
    assert out.shape == (B, 1), out.shape
    assert jnp.allclose(out, ref, atol=1e-5, rtol=1e-5), "mismatch vs reference (B=8)"

    # Also exercise a multi-step grid + ragged batch (padding path).
    B2 = 300
    x2 = jax.random.normal(jax.random.PRNGKey(1), (B2, 9), dtype=jnp.float32)
    out2 = jax.block_until_ready(mlp_forward(x2, params, tile_b=128))
    ref2 = mlp_reference(x2, params)
    assert out2.shape == (B2, 1), out2.shape
    assert jnp.allclose(out2, ref2, atol=1e-5, rtol=1e-5), "mismatch vs reference (B=300)"

    print("KERNEL_OK")
</pallas_src>

<mosaic_0001>
module attributes {stable_mosaic.version = 11 : i64} {
  func.func @mlp_kernel(%arg0: i32, %arg1: memref<128x9xf32, #tpu.memory_space<vmem>>, %arg2: memref<64x9xf32, #tpu.memory_space<vmem>>, %arg3: memref<64x1xf32, #tpu.memory_space<vmem>>, %arg4: memref<64x64xf32, #tpu.memory_space<vmem>>, %arg5: memref<64x1xf32, #tpu.memory_space<vmem>>, %arg6: memref<1x64xf32, #tpu.memory_space<vmem>>, %arg7: memref<1x1xf32, #tpu.memory_space<vmem>>, %arg8: memref<1x128xf32, #tpu.memory_space<vmem>>) attributes {dimension_semantics = [#tpu.dimension_semantics<parallel>], iteration_bounds = array<i64: 1>, scalar_prefetch = 0 : i64, scratch_operands = 0 : i64, tpu.core_type = #tpu.core_type<tc>, window_params = [{transform_indices = @transform_0, window_bounds = array<i64: 128, 9>}, {pipeline_mode = #tpu.pipeline_mode<synchronous>, transform_indices = @transform_1, window_bounds = array<i64: 64, 9>}, {pipeline_mode = #tpu.pipeline_mode<synchronous>, transform_indices = @transform_2, window_bounds = array<i64: 64, 1>}, {pipeline_mode = #tpu.pipeline_mode<synchronous>, transform_indices = @transform_3, window_bounds = array<i64: 64, 64>}, {pipeline_mode = #tpu.pipeline_mode<synchronous>, transform_indices = @transform_4, window_bounds = array<i64: 64, 1>}, {pipeline_mode = #tpu.pipeline_mode<synchronous>, transform_indices = @transform_5, window_bounds = array<i64: 1, 64>}, {pipeline_mode = #tpu.pipeline_mode<synchronous>, transform_indices = @transform_6, window_bounds = array<i64: 1, 1>}, {transform_indices = @transform_7, window_bounds = array<i64: 1, 128>}]} {
    %c0 = arith.constant 0 : index
    %c0_0 = arith.constant 0 : index
    %0 = vector.load %arg1[%c0, %c0_0] : memref<128x9xf32, #tpu.memory_space<vmem>>, vector<128x9xf32>
    %c0_1 = arith.constant 0 : index
    %c0_2 = arith.constant 0 : index
    %1 = vector.load %arg2[%c0_1, %c0_2] : memref<64x9xf32, #tpu.memory_space<vmem>>, vector<64x9xf32>
    %cst = arith.constant dense<0.000000e+00> : vector<64x128xf32>
    %2 = tpu.matmul %1, %0, %cst {dimension_numbers = #tpu.dot_dimension_numbers<[1], [1], [0], [0], [0, 0, 1, 0], [], []>} : vector<64x9xf32>, vector<128x9xf32>, vector<64x128xf32> -> vector<64x128xf32>
    %c0_3 = arith.constant 0 : index
    %c0_4 = arith.constant 0 : index
    %3 = vector.load %arg3[%c0_3, %c0_4] : memref<64x1xf32, #tpu.memory_space<vmem>>, vector<64x1xf32>
    %4 = vector.broadcast %3 : vector<64x1xf32> to vector<64x128xf32>
    %5 = arith.addf %2, %4 : vector<64x128xf32>
    %cst_5 = arith.constant 0.000000e+00 : f32
    %6 = vector.broadcast %cst_5 : f32 to vector<64x128xf32>
    %7 = arith.maximumf %5, %6 : vector<64x128xf32>
    %c0_6 = arith.constant 0 : index
    %c0_7 = arith.constant 0 : index
    %8 = vector.load %arg4[%c0_6, %c0_7] : memref<64x64xf32, #tpu.memory_space<vmem>>, vector<64x64xf32>
    %cst_8 = arith.constant dense<0.000000e+00> : vector<64x128xf32>
    %9 = tpu.matmul %8, %7, %cst_8 {dimension_numbers = #tpu.dot_dimension_numbers<[1], [0], [0], [1], [0, 0, 1, 1], [], []>} : vector<64x64xf32>, vector<64x128xf32>, vector<64x128xf32> -> vector<64x128xf32>
    %c0_9 = arith.constant 0 : index
    %c0_10 = arith.constant 0 : index
    %10 = vector.load %arg5[%c0_9, %c0_10] : memref<64x1xf32, #tpu.memory_space<vmem>>, vector<64x1xf32>
    %11 = vector.broadcast %10 : vector<64x1xf32> to vector<64x128xf32>
    %12 = arith.addf %9, %11 : vector<64x128xf32>
    %cst_11 = arith.constant 0.000000e+00 : f32
    %13 = vector.broadcast %cst_11 : f32 to vector<64x128xf32>
    %14 = arith.maximumf %12, %13 : vector<64x128xf32>
    %c0_12 = arith.constant 0 : index
    %c0_13 = arith.constant 0 : index
    %15 = vector.load %arg6[%c0_12, %c0_13] : memref<1x64xf32, #tpu.memory_space<vmem>>, vector<1x64xf32>
    %cst_14 = arith.constant dense<0.000000e+00> : vector<1x128xf32>
    %16 = tpu.matmul %15, %14, %cst_14 {dimension_numbers = #tpu.dot_dimension_numbers<[1], [0], [0], [1], [0, 0, 1, 1], [], []>} : vector<1x64xf32>, vector<64x128xf32>, vector<1x128xf32> -> vector<1x128xf32>
    %c0_15 = arith.constant 0 : index
    %c0_16 = arith.constant 0 : index
    %17 = vector.load %arg7[%c0_15, %c0_16] : memref<1x1xf32, #tpu.memory_space<vmem>>, vector<1x1xf32>
    %18 = vector.broadcast %17 : vector<1x1xf32> to vector<1x128xf32>
    %19 = arith.addf %16, %18 : vector<1x128xf32>
    %cst_17 = arith.constant 0.000000e+00 : f32
    %20 = vector.broadcast %cst_17 : f32 to vector<1x128xf32>
    %21 = arith.maximumf %19, %20 : vector<1x128xf32>
    %c0_18 = arith.constant 0 : index
    %c0_19 = arith.constant 0 : index
    %22 = vector.load %arg8[%c0_18, %c0_19] : memref<1x128xf32, #tpu.memory_space<vmem>>, vector<1x128xf32>
    tpu.vector_store %arg8[%c0_18, %c0_19], %21 {strides = array<i32>} : memref<1x128xf32, #tpu.memory_space<vmem>>, vector<1x128xf32>,
    return
  }
  func.func @transform_0(%arg0: i32) -> (i32, i32) {
    %c0_i32 = arith.constant 0 : i32
    %c0_i32_0 = arith.constant 0 : i32
    return %arg0, %c0_i32 : i32, i32
  }
  func.func @transform_1(%arg0: i32) -> (i32, i32) {
    %c0_i32 = arith.constant 0 : i32
    %c0_i32_0 = arith.constant 0 : i32
    %c0_i32_1 = arith.constant 0 : i32
    return %c0_i32, %c0_i32_0 : i32, i32
  }
  func.func @transform_2(%arg0: i32) -> (i32, i32) {
    %c0_i32 = arith.constant 0 : i32
    %c0_i32_0 = arith.constant 0 : i32
    %c0_i32_1 = arith.constant 0 : i32
    return %c0_i32, %c0_i32_0 : i32, i32
  }
  func.func @transform_3(%arg0: i32) -> (i32, i32) {
    %c0_i32 = arith.constant 0 : i32
    %c0_i32_0 = arith.constant 0 : i32
    %c0_i32_1 = arith.constant 0 : i32
    return %c0_i32, %c0_i32_0 : i32, i32
  }
  func.func @transform_4(%arg0: i32) -> (i32, i32) {
    %c0_i32 = arith.constant 0 : i32
    %c0_i32_0 = arith.constant 0 : i32
    %c0_i32_1 = arith.constant 0 : i32
    return %c0_i32, %c0_i32_0 : i32, i32
  }
  func.func @transform_5(%arg0: i32) -> (i32, i32) {
    %c0_i32 = arith.constant 0 : i32
    %c0_i32_0 = arith.constant 0 : i32
    %c0_i32_1 = arith.constant 0 : i32
    return %c0_i32, %c0_i32_0 : i32, i32
  }
  func.func @transform_6(%arg0: i32) -> (i32, i32) {
    %c0_i32 = arith.constant 0 : i32
    %c0_i32_0 = arith.constant 0 : i32
    %c0_i32_1 = arith.constant 0 : i32
    return %c0_i32, %c0_i32_0 : i32, i32
  }
  func.func @transform_7(%arg0: i32) -> (i32, i32) {
    %c0_i32 = arith.constant 0 : i32
    %c0_i32_0 = arith.constant 0 : i32
    return %c0_i32, %arg0 : i32, i32
  }
}

</mosaic_0001>

<llo_original>
// kernel: tpu_custom_call.1
$region0: #{tpu_custom_call.1}
  #allocation0 [shape = 'u32[]', space=smem, size = 0x4, offset = 0x4, fixed_abs, tag = 'smem constant byte address 0x4 - core index']
  #allocation1 [shape = 'u32[144,128]{1,0:T(1,128)}', space=vmem, size = 0x12000, scoped, tag = 'internal scratch']
  #allocation2 [shape = 'f32[1,1]{1,0:T(1,128)S(1)}', space=vmem, size = 0x200, scoped, tag = 'scoped memory for tpu_custom_call.1']
  %s0 = inlined_call_operand.vmem [shape: f32[128,9], index: 0, kind: input, shape index: {}]
  %s1 = inlined_call_operand.vmem [shape: f32[64,9], index: 1, kind: input, shape index: {}]
  %s2 = inlined_call_operand.vmem [shape: f32[64,1], index: 2, kind: input, shape index: {}]
  %s3 = inlined_call_operand.vmem [shape: f32[64,64], index: 3, kind: input, shape index: {}]
  %s4 = inlined_call_operand.vmem [shape: f32[64,1], index: 4, kind: input, shape index: {}]
  %s5 = inlined_call_operand.vmem [shape: f32[1,64], index: 5, kind: input, shape index: {}]
  %s6 = inlined_call_operand.<no memory space> [shape: f32[1,1], index: 6, kind: input, shape index: {}]
  %s7 = inlined_call_operand.hbm [shape: f32[1,128], index: 7, kind: output, shape index: {}]
  %s8 = sld [smem:[#allocation0]]
  $region38: #{tpu_custom_call.1} parent=0
    _
  %s10 = ssub.s32 1, %s8
  %s11 = scalar_select 0, %s10, %s8
  %v12 = vstv %s6
  %13 = vst [vmem:[#allocation2] sm:$0x1] %v12
  $region1: #{tpu_custom_call.1} parent=0
    #allocation3 [shape = 'u8[512]{0}', space=vmem, size = 0x400, scoped, tag = 'output window, operand 0, single buffered']
    #allocation4 [shape = 's32[1]{0}', space=sflag, size = 0x4, scoped, tag = 'scoped memory for tpu_custom_call.1']
    %14 = vsyncpa [#allocation4], 0
    // Predicated region
    $region2: #{tpu_custom_call.1} parent=1 // pred_check
      _
    $region3: #{tpu_custom_call.1} parent=1 // pred_check_branch
      %16 = sbr.rel (0) target = $region5
    $region4: #{tpu_custom_call.1} parent=1 // pred_region
      _
    $region5: #{tpu_custom_call.1} parent=1 // pred_fallthru
      _
    // Predicated region
    $region6: #{tpu_custom_call.1} parent=1 // pred_check
      _
    $region7: #{tpu_custom_call.1} parent=1 // pred_check_branch
      %18 = sbr.rel (0) target = $region9
    $region8: #{tpu_custom_call.1} parent=1 // pred_region
      _
    $region9: #{tpu_custom_call.1} parent=1 // pred_fallthru
      _
    // Predicated region
    $region10: #{tpu_custom_call.1} parent=1 // pred_check
      _
    $region11: #{tpu_custom_call.1} parent=1 // pred_check_branch
      %20 = sbr.rel (0) target = $region13
    $region12: #{tpu_custom_call.1} parent=1 // pred_region
      _
    $region13: #{tpu_custom_call.1} parent=1 // pred_fallthru
      _
    // Predicated region
    $region14: #{tpu_custom_call.1} parent=1 // pred_check
      _
    $region15: #{tpu_custom_call.1} parent=1 // pred_check_branch
      %22 = sbr.rel (0) target = $region17
    $region16: #{tpu_custom_call.1} parent=1 // pred_region
      _
    $region17: #{tpu_custom_call.1} parent=1 // pred_fallthru
      _
    // Predicated region
    $region18: #{tpu_custom_call.1} parent=1 // pred_check
      _
    $region19: #{tpu_custom_call.1} parent=1 // pred_check_branch
      %24 = sbr.rel (0) target = $region21
    $region20: #{tpu_custom_call.1} parent=1 // pred_region
      _
    $region21: #{tpu_custom_call.1} parent=1 // pred_fallthru
      _
    // Predicated region
    $region22: #{tpu_custom_call.1} parent=1 // pred_check
      _
    $region23: #{tpu_custom_call.1} parent=1 // pred_check_branch
      %26 = sbr.rel (0) target = $region25
    $region24: #{tpu_custom_call.1} parent=1 // pred_region
      _
    $region25: #{tpu_custom_call.1} parent=1 // pred_fallthru
      _
    // Predicated region
    $region26: #{tpu_custom_call.1} parent=1 // pred_check
      _
    $region27: #{tpu_custom_call.1} parent=1 // pred_check_branch
      %28 = sbr.rel (0) target = $region29
    $region28: #{tpu_custom_call.1} parent=1 // pred_region
      _
    $region29: #{tpu_custom_call.1} parent=1 // pred_fallthru
      _
    %v29 = vld [vmem:[%s0] sm:$0xff]
    %v30 = vld [vmem:[%s0 + $0x8] sm:$0xff]
    %v31 = vld [vmem:[%s0 + $0x10] sm:$0xff]
    %v32 = vld [vmem:[%s0 + $0x18] sm:$0xff]
    %v33 = vld [vmem:[%s0 + $0x20] sm:$0xff]
    %v34 = vld [vmem:[%s0 + $0x28] sm:$0xff]
    %v35 = vld [vmem:[%s0 + $0x30] sm:$0xff]
    %v36 = vld [vmem:[%s0 + $0x38] sm:$0xff]
    %v37 = vld [vmem:[%s0 + $0x40] sm:$0xff]
    %v38 = vld [vmem:[%s0 + $0x48] sm:$0xff]
    %v39 = vld [vmem:[%s0 + $0x50] sm:$0xff]
    %v40 = vld [vmem:[%s0 + $0x58] sm:$0xff]
    %v41 = vld [vmem:[%s0 + $0x60] sm:$0xff]
    %v42 = vld [vmem:[%s0 + $0x68] sm:$0xff]
    %v43 = vld [vmem:[%s0 + $0x70] sm:$0xff]
    %v44 = vld [vmem:[%s0 + $0x78] sm:$0xff]
    %v45 = vld [vmem:[%s1] sm:$0xff]
    %v46 = vld [vmem:[%s1 + $0x8] sm:$0xff]
    %v47 = vld [vmem:[%s1 + $0x10] sm:$0xff]
    %v48 = vld [vmem:[%s1 + $0x18] sm:$0xff]
    %v49 = vld [vmem:[%s1 + $0x20] sm:$0xff]
    %v50 = vld [vmem:[%s1 + $0x28] sm:$0xff]
    %v51 = vld [vmem:[%s1 + $0x30] sm:$0xff]
    %v52 = vld [vmem:[%s1 + $0x38] sm:$0xff]
    %v53 = vld [vmem:[%s2] sm:$0xff]
    %v54 = vld [vmem:[%s2 + $0x8] sm:$0xff]
    %v55 = vld [vmem:[%s2 + $0x10] sm:$0xff]
    %v56 = vld [vmem:[%s2 + $0x18] sm:$0xff]
    %v57 = vld [vmem:[%s2 + $0x20] sm:$0xff]
    %v58 = vld [vmem:[%s2 + $0x28] sm:$0xff]
    %v59 = vld [vmem:[%s2 + $0x30] sm:$0xff]
    %v60 = vld [vmem:[%s2 + $0x38] sm:$0xff]
    %62 = vset.pattern.permute.xlu0 0
    %63 = vperm.xlu0 %62, %v53
    %v64 = vpop.permute.xlu0 %63
    %67 = vset.pattern.permute.xlu0 0
    %68 = vperm.xlu0 %67, %v54
    %v69 = vpop.permute.xlu0 %68
    %72 = vset.pattern.permute.xlu0 0
    %73 = vperm.xlu0 %72, %v55
    %v74 = vpop.permute.xlu0 %73
    %77 = vset.pattern.permute.xlu0 0
    %78 = vperm.xlu0 %77, %v56
    %v79 = vpop.permute.xlu0 %78
    %82 = vset.pattern.permute.xlu0 0
    %83 = vperm.xlu0 %82, %v57
    %v84 = vpop.permute.xlu0 %83
    %87 = vset.pattern.permute.xlu0 0
    %88 = vperm.xlu0 %87, %v58
    %v89 = vpop.permute.xlu0 %88
    %92 = vset.pattern.permute.xlu0 0
    %93 = vperm.xlu0 %92, %v59
    %v94 = vpop.permute.xlu0 %93
    %97 = vset.pattern.permute.xlu0 0
    %98 = vperm.xlu0 %97, %v60
    %v99 = vpop.permute.xlu0 %98
    %vm101 = vcmask 72704
    %v103 = vsel %vm101, %v45, 0
    %v106 = vsel %vm101, %v46, 0
    %v109 = vsel %vm101, %v47, 0
    %v112 = vsel %vm101, %v48, 0
    %v115 = vsel %vm101, %v49, 0
    %v118 = vsel %vm101, %v50, 0
    %v121 = vsel %vm101, %v51, 0
    %v124 = vsel %vm101, %v52, 0
    %v127 = vsel %vm101, %v29, 0
    %v130 = vsel %vm101, %v30, 0
    %v133 = vsel %vm101, %v31, 0
    %v136 = vsel %vm101, %v32, 0
    %v139 = vsel %vm101, %v33, 0
    %v142 = vsel %vm101, %v34, 0
    %v145 = vsel %vm101, %v35, 0
    %v148 = vsel %vm101, %v36, 0
    %v151 = vsel %vm101, %v37, 0
    %v154 = vsel %vm101, %v38, 0
    %v157 = vsel %vm101, %v39, 0
    %v160 = vsel %vm101, %v40, 0
    %v163 = vsel %vm101, %v41, 0
    %v166 = vsel %vm101, %v42, 0
    %v169 = vsel %vm101, %v43, 0
    %v172 = vsel %vm101, %v44, 0
    %174 = vmatprep.subr.mxu0 0.0
    %175 = vmatpush1.xpose.msra.mxu0 %v127
    %176 = vmatprep.subr.mxu0 0.0
    %177 = vmatpush1.xpose.msra.mxu0 %v130
    %178 = vmatprep.subr.mxu0 0.0
    %179 = vmatpush1.xpose.msra.mxu0 %v133
    %180 = vmatprep.subr.mxu0 0.0
    %181 = vmatpush1.xpose.msra.mxu0 %v136
    %182 = vmatprep.subr.mxu0 0.0
    %183 = vmatpush1.xpose.msra.mxu0 %v139
    %184 = vmatprep.subr.mxu0 0.0
    %185 = vmatpush1.xpose.msra.mxu0 %v142
    %186 = vmatprep.subr.mxu0 0.0
    %187 = vmatpush1.xpose.msra.mxu0 %v145
    %188 = vmatprep.subr.mxu0 0.0
    %189 = vmatpush1.xpose.msra.mxu0 %v148
    %190 = vmatprep.subr.mxu0 0.0
    %191 = vmatpush1.xpose.msra.mxu0 %v151
    %192 = vmatprep.subr.mxu0 0.0
    %193 = vmatpush1.xpose.msra.mxu0 %v154
    %194 = vmatprep.subr.mxu0 0.0
    %195 = vmatpush1.xpose.msra.mxu0 %v157
    %196 = vmatprep.subr.mxu0 0.0
    %197 = vmatpush1.xpose.msra.mxu0 %v160
    %198 = vmatprep.subr.mxu0 0.0
    %199 = vmatpush1.xpose.msra.mxu0 %v163
    %200 = vmatprep.subr.mxu0 0.0
    %201 = vmatpush1.xpose.msra.mxu0 %v166
    %202 = vmatprep.subr.mxu0 0.0
    %203 = vmatpush1.xpose.msra.mxu0 %v169
    %204 = vmatprep.subr.mxu0 0.0
    %205 = vmatpush1.xpose.msra.mxu0 %v172
    %206 = vmatprep.subr.mxu0 0.0
    %207 = vmatpush1.xpose.msra.mxu0 0.0
    %208 = vmatprep.subr.mxu0 0.0
    %209 = vmatpush1.xpose.msra.mxu0 0.0
    %210 = vmatprep.subr.mxu0 0.0
    %211 = vmatpush1.xpose.msra.mxu0 0.0
    %212 = vmatprep.subr.mxu0 0.0
    %213 = vmatpush1.xpose.msra.mxu0 0.0
    %214 = vmatprep.subr.mxu0 0.0
    %215 = vmatpush1.xpose.msra.mxu0 0.0
    %216 = vmatprep.subr.mxu0 0.0
    %217 = vmatpush1.xpose.msra.mxu0 0.0
    %218 = vmatprep.subr.mxu0 0.0
    %219 = vmatpush1.xpose.msra.mxu0 0.0
    %220 = vmatprep.subr.mxu0 0.0
    %221 = vmatpush1.xpose.msra.mxu0 0.0
    %222 = vmatprep.subr.mxu0 0.0
    %223 = vmatpush1.xpose.msra.mxu0 0.0
    %224 = vmatprep.subr.mxu0 0.0
    %225 = vmatpush1.xpose.msra.mxu0 0.0
    %226 = vmatprep.subr.mxu0 0.0
    %227 = vmatpush1.xpose.msra.mxu0 0.0
    %228 = vmatprep.subr.mxu0 0.0
    %229 = vmatpush1.xpose.msra.mxu0 0.0
    %230 = vmatprep.subr.mxu0 0.0
    %231 = vmatpush1.xpose.msra.mxu0 0.0
    %232 = vmatprep.subr.mxu0 0.0
    %233 = vmatpush1.xpose.msra.mxu0 0.0
    %234 = vmatprep.subr.mxu0 0.0
    %235 = vmatpush1.xpose.msra.mxu0 0.0
    %236 = vmatprep.subr.mxu0 0.0
    %237 = vmatpush1.xpose.msra.mxu0 0.0
    %238 = vmatprep.mubr.f32.mxu0 0.0
    %239 = vmatmul.mubr.f32.gmra.mrb[0].mxu0 %v103
    %v240 = vpop.f32.mrb[0].mxu0
    %v241 = vadd.f32 %v64, %v240
    %v242 = vpop.f32.mrb[0].mxu0
    %243 = vmatprep.mubr.f32.mxu0 0.0
    %244 = vmatmul.mubr.f32.gmra.mrb[0].mxu0 %v106
    %v245 = vpop.f32.mrb[0].mxu0
    %v246 = vadd.f32 %v69, %v245
    %v247 = vpop.f32.mrb[0].mxu0
    %248 = vmatprep.mubr.f32.mxu0 0.0
    %249 = vmatmul.mubr.f32.gmra.mrb[0].mxu0 %v109
    %v250 = vpop.f32.mrb[0].mxu0
    %v251 = vadd.f32 %v74, %v250
    %v252 = vpop.f32.mrb[0].mxu0
    %253 = vmatprep.mubr.f32.mxu0 0.0
    %254 = vmatmul.mubr.f32.gmra.mrb[0].mxu0 %v112
    %v255 = vpop.f32.mrb[0].mxu0
    %v256 = vadd.f32 %v79, %v255
    %v257 = vpop.f32.mrb[0].mxu0
    %258 = vmatprep.mubr.f32.mxu0 0.0
    %259 = vmatmul.mubr.f32.gmra.mrb[0].mxu0 %v115
    %v260 = vpop.f32.mrb[0].mxu0
    %v261 = vadd.f32 %v84, %v260
    %v262 = vpop.f32.mrb[0].mxu0
    %263 = vmatprep.mubr.f32.mxu0 0.0
    %264 = vmatmul.mubr.f32.gmra.mrb[0].mxu0 %v118
    %v265 = vpop.f32.mrb[0].mxu0
    %v266 = vadd.f32 %v89, %v265
    %v267 = vpop.f32.mrb[0].mxu0
    %268 = vmatprep.mubr.f32.mxu0 0.0
    %269 = vmatmul.mubr.f32.gmra.mrb[0].mxu0 %v121
    %v270 = vpop.f32.mrb[0].mxu0
    %v271 = vadd.f32 %v94, %v270
    %v272 = vpop.f32.mrb[0].mxu0
    %273 = vmatprep.mubr.f32.mxu0 0.0
    %274 = vmatmul.mubr.f32.gmra.mrb[0].mxu0 %v124
    %v275 = vpop.f32.mrb[0].mxu0
    %v276 = vadd.f32 %v99, %v275
    %v277 = vpop.f32.mrb[0].mxu0
    %278 = vdwg.mxu0
    %v279 = vmax.f32 %v241, 0.0
    %v280 = vmax.f32 %v246, 0.0
    %v281 = vmax.f32 %v251, 0.0
    %v282 = vmax.f32 %v256, 0.0
    %v283 = vmax.f32 %v261, 0.0
    %v284 = vmax.f32 %v266, 0.0
    %v285 = vmax.f32 %v271, 0.0
    %v286 = vmax.f32 %v276, 0.0
    %v287 = vld [vmem:[%s3] sm:$0xff]
    %v288 = vld [vmem:[%s3 + $0x8] sm:$0xff]
    %v289 = vld [vmem:[%s3 + $0x10] sm:$0xff]
    %v290 = vld [vmem:[%s3 + $0x18] sm:$0xff]
    %v291 = vld [vmem:[%s3 + $0x20] sm:$0xff]
    %v292 = vld [vmem:[%s3 + $0x28] sm:$0xff]
    %v293 = vld [vmem:[%s3 + $0x30] sm:$0xff]
    %v294 = vld [vmem:[%s3 + $0x38] sm:$0xff]
    %v295 = vld [vmem:[%s4] sm:$0xff]
    %v296 = vld [vmem:[%s4 + $0x8] sm:$0xff]
    %v297 = vld [vmem:[%s4 + $0x10] sm:$0xff]
    %v298 = vld [vmem:[%s4 + $0x18] sm:$0xff]
    %v299 = vld [vmem:[%s4 + $0x20] sm:$0xff]
    %v300 = vld [vmem:[%s4 + $0x28] sm:$0xff]
    %v301 = vld [vmem:[%s4 + $0x30] sm:$0xff]
    %v302 = vld [vmem:[%s4 + $0x38] sm:$0xff]
    %304 = vset.pattern.permute.xlu0 0
    %305 = vperm.xlu0 %304, %v295
    %v306 = vpop.permute.xlu0 %305
    %309 = vset.pattern.permute.xlu0 0
    %310 = vperm.xlu0 %309, %v296
    %v311 = vpop.permute.xlu0 %310
    %314 = vset.pattern.permute.xlu0 0
    %315 = vperm.xlu0 %314, %v297
    %v316 = vpop.permute.xlu0 %315
    %319 = vset.pattern.permute.xlu0 0
    %320 = vperm.xlu0 %319, %v298
    %v321 = vpop.permute.xlu0 %320
    %324 = vset.pattern.permute.xlu0 0
    %325 = vperm.xlu0 %324, %v299
    %v326 = vpop.permute.xlu0 %325
    %329 = vset.pattern.permute.xlu0 0
    %330 = vperm.xlu0 %329, %v300
    %v331 = vpop.permute.xlu0 %330
    %334 = vset.pattern.permute.xlu0 0
    %335 = vperm.xlu0 %334, %v301
    %v336 = vpop.permute.xlu0 %335
    %339 = vset.pattern.permute.xlu0 0
    %340 = vperm.xlu0 %339, %v302
    %v341 = vpop.permute.xlu0 %340
    %vm343 = vcmask 523264
    %v345 = vsel %vm343, %v287, 0
    %v348 = vsel %vm343, %v288, 0
    %v351 = vsel %vm343, %v289, 0
    %v354 = vsel %vm343, %v290, 0
    %v357 = vsel %vm343, %v291, 0
    %v360 = vsel %vm343, %v292, 0
    %v363 = vsel %vm343, %v293, 0
    %v366 = vsel %vm343, %v294, 0
    %368 = vmatprep.subr.mxu0 0.0
    %369 = vmatpush1.msra.mxu0 %v279
    %370 = vmatprep.subr.mxu0 0.0
    %371 = vmatpush1.msra.mxu0 %v280
    %372 = vmatprep.subr.mxu0 0.0
    %373 = vmatpush1.msra.mxu0 %v281
    %374 = vmatprep.subr.mxu0 0.0
    %375 = vmatpush1.msra.mxu0 %v282
    %376 = vmatprep.subr.mxu0 0.0
    %377 = vmatpush1.msra.mxu0 %v283
    %378 = vmatprep.subr.mxu0 0.0
    %379 = vmatpush1.msra.mxu0 %v284
    %380 = vmatprep.subr.mxu0 0.0
    %381 = vmatpush1.msra.mxu0 %v285
    %382 = vmatprep.subr.mxu0 0.0
    %383 = vmatpush1.msra.mxu0 %v286
    %384 = vmatprep.subr.mxu0 0.0
    %385 = vmatpush1.msra.mxu0 0.0
    %386 = vmatprep.subr.mxu0 0.0
    %387 = vmatpush1.msra.mxu0 0.0
    %388 = vmatprep.subr.mxu0 0.0
    %389 = vmatpush1.msra.mxu0 0.0
    %390 = vmatprep.subr.mxu0 0.0
    %391 = vmatpush1.msra.mxu0 0.0
    %392 = vmatprep.subr.mxu0 0.0
    %393 = vmatpush1.msra.mxu0 0.0
    %394 = vmatprep.subr.mxu0 0.0
    %395 = vmatpush1.msra.mxu0 0.0
    %396 = vmatprep.subr.mxu0 0.0
    %397 = vmatpush1.msra.mxu0 0.0
    %398 = vmatprep.subr.mxu0 0.0
    %399 = vmatpush1.msra.mxu0 0.0
    %400 = vmatprep.subr.mxu0 0.0
    %401 = vmatpush1.msra.mxu0 0.0
    %402 = vmatprep.subr.mxu0 0.0
    %403 = vmatpush1.msra.mxu0 0.0
    %404 = vmatprep.subr.mxu0 0.0
    %405 = vmatpush1.msra.mxu0 0.0
    %406 = vmatprep.subr.mxu0 0.0
    %407 = vmatpush1.msra.mxu0 0.0
    %408 = vmatprep.subr.mxu0 0.0
    %409 = vmatpush1.msra.mxu0 0.0
    %410 = vmatprep.subr.mxu0 0.0
    %411 = vmatpush1.msra.mxu0 0.0
    %412 = vmatprep.subr.mxu0 0.0
    %413 = vmatpush1.msra.mxu0 0.0
    %414 = vmatprep.subr.mxu0 0.0
    %415 = vmatpush1.msra.mxu0 0.0
    %416 = vmatprep.subr.mxu0 0.0
    %417 = vmatpush1.msra.mxu0 0.0
    %418 = vmatprep.subr.mxu0 0.0
    %419 = vmatpush1.msra.mxu0 0.0
    %420 = vmatprep.subr.mxu0 0.0
    %421 = vmatpush1.msra.mxu0 0.0
    %422 = vmatprep.subr.mxu0 0.0
    %423 = vmatpush1.msra.mxu0 0.0
    %424 = vmatprep.subr.mxu0 0.0
    %425 = vmatpush1.msra.mxu0 0.0
    %426 = vmatprep.subr.mxu0 0.0
    %427 = vmatpush1.msra.mxu0 0.0
    %428 = vmatprep.subr.mxu0 0.0
    %429 = vmatpush1.msra.mxu0 0.0
    %430 = vmatprep.subr.mxu0 0.0
    %431 = vmatpush1.msra.mxu0 0.0
    %432 = vmatprep.mubr.f32.mxu0 0.0
    %433 = vmatmul.mubr.f32.gmra.mrb[0].mxu0 %v345
    %v434 = vpop.f32.mrb[0].mxu0
    %v435 = vadd.f32 %v306, %v434
    %v436 = vpop.f32.mrb[0].mxu0
    %437 = vmatprep.mubr.f32.mxu0 0.0
    %438 = vmatmul.mubr.f32.gmra.mrb[0].mxu0 %v348
    %v439 = vpop.f32.mrb[0].mxu0
    %v440 = vadd.f32 %v311, %v439
    %v441 = vpop.f32.mrb[0].mxu0
    %442 = vmatprep.mubr.f32.mxu0 0.0
    %443 = vmatmul.mubr.f32.gmra.mrb[0].mxu0 %v351
    %v444 = vpop.f32.mrb[0].mxu0
    %v445 = vadd.f32 %v316, %v444
    %v446 = vpop.f32.mrb[0].mxu0
    %447 = vmatprep.mubr.f32.mxu0 0.0
    %448 = vmatmul.mubr.f32.gmra.mrb[0].mxu0 %v354
    %v449 = vpop.f32.mrb[0].mxu0
    %v450 = vadd.f32 %v321, %v449
    %v451 = vpop.f32.mrb[0].mxu0
    %452 = vmatprep.mubr.f32.mxu0 0.0
    %453 = vmatmul.mubr.f32.gmra.mrb[0].mxu0 %v357
    %v454 = vpop.f32.mrb[0].mxu0
    %v455 = vadd.f32 %v326, %v454
    %v456 = vpop.f32.mrb[0].mxu0
    %457 = vmatprep.mubr.f32.mxu0 0.0
    %458 = vmatmul.mubr.f32.gmra.mrb[0].mxu0 %v360
    %v459 = vpop.f32.mrb[0].mxu0
    %v460 = vadd.f32 %v331, %v459
    %v461 = vpop.f32.mrb[0].mxu0
    %462 = vmatprep.mubr.f32.mxu0 0.0
    %463 = vmatmul.mubr.f32.gmra.mrb[0].mxu0 %v363
    %v464 = vpop.f32.mrb[0].mxu0
    %v465 = vadd.f32 %v336, %v464
    %v466 = vpop.f32.mrb[0].mxu0
    %467 = vmatprep.mubr.f32.mxu0 0.0
    %468 = vmatmul.mubr.f32.gmra.mrb[0].mxu0 %v366
    %v469 = vpop.f32.mrb[0].mxu0
    %v470 = vadd.f32 %v341, %v469
    %v471 = vpop.f32.mrb[0].mxu0
    %472 = vdwg.mxu0
    %v473 = vmax.f32 %v435, 0.0
    %v474 = vmax.f32 %v440, 0.0
    %v475 = vmax.f32 %v445, 0.0
    %v476 = vmax.f32 %v450, 0.0
    %v477 = vmax.f32 %v455, 0.0
    %v478 = vmax.f32 %v460, 0.0
    %v479 = vmax.f32 %v465, 0.0
    %v480 = vmax.f32 %v470, 0.0
    %v481 = vld [vmem:[%s5] sm:$0x1]
    %v482 = vld [vmem:[#allocation2] sm:$0x1]
    %484 = vset.pattern.permute.xlu0 0
    %485 = vperm.xlu0 %484, %v482
    %v486 = vpop.permute.xlu0 %485
    %v488 = vlaneseq
    %v489 = vshrl.u32 %v488, 7
    %v490 = vsub.s32 0, %v489
    %v491 = vrot.slane %v486, %v490
    %v493 = vsel %vm343, %v481, 0
    %495 = vmatprep.subr.mxu0 0.0
    %496 = vmatpush1.msra.mxu0 %v473
    %497 = vmatprep.subr.mxu0 0.0
    %498 = vmatpush1.msra.mxu0 %v474
    %499 = vmatprep.subr.mxu0 0.0
    %500 = vmatpush1.msra.mxu0 %v475
    %501 = vmatprep.subr.mxu0 0.0
    %502 = vmatpush1.msra.mxu0 %v476
    %503 = vmatprep.subr.mxu0 0.0
    %504 = vmatpush1.msra.mxu0 %v477
    %505 = vmatprep.subr.mxu0 0.0
    %506 = vmatpush1.msra.mxu0 %v478
    %507 = vmatprep.subr.mxu0 0.0
    %508 = vmatpush1.msra.mxu0 %v479
    %509 = vmatprep.subr.mxu0 0.0
    %510 = vmatpush1.msra.mxu0 %v480
    %511 = vmatprep.subr.mxu0 0.0
    %512 = vmatpush1.msra.mxu0 0.0
    %513 = vmatprep.subr.mxu0 0.0
    %514 = vmatpush1.msra.mxu0 0.0
    %515 = vmatprep.subr.mxu0 0.0
    %516 = vmatpush1.msra.mxu0 0.0
    %517 = vmatprep.subr.mxu0 0.0
    %518 = vmatpush1.msra.mxu0 0.0
    %519 = vmatprep.subr.mxu0 0.0
    %520 = vmatpush1.msra.mxu0 0.0
    %521 = vmatprep.subr.mxu0 0.0
    %522 = vmatpush1.msra.mxu0 0.0
    %523 = vmatprep.subr.mxu0 0.0
    %524 = vmatpush1.msra.mxu0 0.0
    %525 = vmatprep.subr.mxu0 0.0
    %526 = vmatpush1.msra.mxu0 0.0
    %527 = vmatprep.subr.mxu0 0.0
    %528 = vmatpush1.msra.mxu0 0.0
    %529 = vmatprep.subr.mxu0 0.0
    %530 = vmatpush1.msra.mxu0 0.0
    %531 = vmatprep.subr.mxu0 0.0
    %532 = vmatpush1.msra.mxu0 0.0
    %533 = vmatprep.subr.mxu0 0.0
    %534 = vmatpush1.msra.mxu0 0.0
    %535 = vmatprep.subr.mxu0 0.0
    %536 = vmatpush1.msra.mxu0 0.0
    %537 = vmatprep.subr.mxu0 0.0
    %538 = vmatpush1.msra.mxu0 0.0
    %539 = vmatprep.subr.mxu0 0.0
    %540 = vmatpush1.msra.mxu0 0.0
    %541 = vmatprep.subr.mxu0 0.0
    %542 = vmatpush1.msra.mxu0 0.0
    %543 = vmatprep.subr.mxu0 0.0
    %544 = vmatpush1.msra.mxu0 0.0
    %545 = vmatprep.subr.mxu0 0.0
    %546 = vmatpush1.msra.mxu0 0.0
    %547 = vmatprep.subr.mxu0 0.0
    %548 = vmatpush1.msra.mxu0 0.0
    %549 = vmatprep.subr.mxu0 0.0
    %550 = vmatpush1.msra.mxu0 0.0
    %551 = vmatprep.subr.mxu0 0.0
    %552 = vmatpush1.msra.mxu0 0.0
    %553 = vmatprep.subr.mxu0 0.0
    %554 = vmatpush1.msra.mxu0 0.0
    %555 = vmatprep.subr.mxu0 0.0
    %556 = vmatpush1.msra.mxu0 0.0
    %557 = vmatprep.subr.mxu0 0.0
    %558 = vmatpush1.msra.mxu0 0.0
    %559 = vmatprep.mubr.f32.mxu0 0.0
    %560 = vmatmul.mubr.f32.gmra.mrb[0].mxu0 %v493
    %v561 = vpop.f32.mrb[0].mxu0
    %v562 = vadd.f32 %v491, %v561
    %v563 = vpop.f32.mrb[0].mxu0
    %564 = vdwg.mxu0
    %v565 = vmax.f32 %v562, 0.0
    %566 = vst [vmem:[#allocation3] sm:$0x1] %v565
    // Predicated region
    $region30: #{tpu_custom_call.1} parent=1 // pred_check
      _
    $region31: #{tpu_custom_call.1} parent=1 // pred_check_branch
      %568 = sbr.rel (0) target = $region33
    $region32: #{tpu_custom_call.1} parent=1 // pred_region
      %s570 = ssub.s32 16, 16
      %571 = vsyncadd [#allocation4], %s570
      %s573 = sshll.u32 [#allocation3], 4
      %s574 = int_to_ptr.vmem [resolvable:$true] %s573
      %576 = dma.vmem_to_hbm [thread:$0]  %s574, 16, %s7, [#allocation4]
    $region33: #{tpu_custom_call.1} parent=1 // pred_fallthru
      _
    // Predicated region
    $region34: #{tpu_custom_call.1} parent=1 // pred_check
      _
    $region35: #{tpu_custom_call.1} parent=1 // pred_check_branch
      %578 = sbr.rel (0) target = $region37
    $region36: #{tpu_custom_call.1} parent=1 // pred_region
      %579 = dma.done [#allocation4], 16
    $region37: #{tpu_custom_call.1} parent=1 // pred_fallthru
      _
    %580 = vsyncpa [#allocation4], 1

</llo_original>
